<compile_context>
chip_gen: v7x
topology: tpu7x:2x2x1
jax: 0.10.0
libtpu: 0.0.40
codegen_flags: <defaults>
</compile_context>

<pallas_src>
import math

import jax
import jax.numpy as jnp
import numpy as np
from jax.experimental import pallas as pl
from jax.experimental.pallas import tpu as pltpu


_TARGET_TILE_BYTES = 4 << 20   # ~4 MiB output tile; x2 (double buffer) << 32 MiB scoped VMEM
_MIN_GRID_STEPS = 8            # keep the grid long enough to shard across TCs / pipeline


def _round_up(x, m):
    return (x + m - 1) // m * m


def _sublane_pack(dtype):
    # f32 -> 8, bf16 -> 16, int8/fp8 -> 32 (full store vregs at tile edges).
    return max(8, 32 // jnp.dtype(dtype).itemsize)


def _packed_matmul_kernel(e_ref, L_ref, o_ref):
    """Lane-dense path.

    e_ref: (tr, gE) f32   -- gE consecutive e values per packed output row
    L_ref: (gE, W)  f32   -- L[j, l] = lin[l % dim] * (l // dim == j)
    o_ref: (tr, W)        -- packed output, row-major identical to (tr*gE, dim)
    """
    o_ref[...] = jnp.dot(e_ref[...], L_ref[...],
                         preferred_element_type=jnp.float32).astype(o_ref.dtype)


def _simple_kernel(e_ref, lin_ref, o_ref):
    """Fallback: e_ref (tile_n, 1), lin_ref (1, dim), o_ref (tile_n, dim)."""
    o_ref[...] = e_ref[...] * lin_ref[...]


def _pick_tile(rows, width_lanes, itemsize, sub):
    """Tile rows: ~_TARGET_TILE_BYTES per output block, multiple of the sublane
    pack, derived from `rows` so the grid keeps >= _MIN_GRID_STEPS steps."""
    cap = max(sub, (_TARGET_TILE_BYTES // (width_lanes * itemsize)) // sub * sub)
    tr = min(cap, _round_up(pl.cdiv(rows, _MIN_GRID_STEPS), sub))
    if tr >= rows:
        tr = rows  # single full-extent block (no (8,128) divisibility constraint)
    return tr


def id_encoding(e, lin):
    """pe[..., d] = e[...] * lin[d]  (IdEncoding.forward, incl. dtype promotion)."""
    dim = int(lin.shape[0])
    lead_shape = e.shape
    n = int(np.prod(lead_shape, dtype=np.int64)) if lead_shape else 1
    out_dtype = jnp.result_type(e.dtype, lin.dtype)
    itemsize = jnp.dtype(out_dtype).itemsize
    sub = _sublane_pack(out_dtype)

    e_flat = e.reshape(n)

    g = math.gcd(dim, 128)
    period = dim // g          # packed rows of 128 lanes per repetition
    gE = 128 // g              # e-rows folded into one packed row of W lanes
    use_packed = (dim % 128 != 0) and (period <= 16)

    if use_packed:
        W = period * 128                       # packed row width (lanes), multiple of 128
        gE = W // dim
        rows = pl.cdiv(n, gE)
        pad = rows * gE - n
        if pad:
            # TODO(synk): when n % gE != 0 the [:n] slice below materializes a
            # full-output copy; the common path (n % gE == 0) has zero pad/copy.
            e_flat = jnp.pad(e_flat, (0, pad))
        e2 = e_flat.reshape(rows, gE).astype(jnp.float32)

        # Selection matrix folded with lin (built once, tiny, pre-cast to f32).
        c = np.arange(W)
        sel = jnp.asarray((c // dim)[None, :] == np.arange(gE)[:, None])
        L = jnp.where(sel, lin.astype(jnp.float32)[c % dim][None, :], jnp.float32(0))

        tr = _pick_tile(rows, W, itemsize, sub)
        grid = (pl.cdiv(rows, tr),)            # partial last block handled by Pallas masking

        out = pl.pallas_call(
            _packed_matmul_kernel,
            out_shape=jax.ShapeDtypeStruct((rows, W), out_dtype),
            grid_spec=pltpu.PrefetchScalarGridSpec(
                num_scalar_prefetch=0,
                grid=grid,
                in_specs=[
                    pl.BlockSpec((tr, gE), lambda i: (i, 0)),
                    pl.BlockSpec((gE, W), lambda i: (0, 0)),
                ],
                out_specs=pl.BlockSpec((tr, W), lambda i: (i, 0)),
            ),
            compiler_params=pltpu.CompilerParams(
                dimension_semantics=("parallel",)),
        )(e2, L)

        pe_flat = out.reshape(rows * gE, dim)
        if pad:
            pe_flat = pe_flat[:n]
    else:
        # dim % 128 == 0 (already lane-dense) or huge period: (tile_n, dim) blocks.
        dim_pad = _round_up(dim, 128)
        e2 = e_flat.reshape(n, 1).astype(out_dtype)
        lin2 = lin.reshape(1, dim).astype(out_dtype)

        tn = _pick_tile(n, dim_pad, itemsize, sub)
        grid = (pl.cdiv(n, tn),)               # partial last block handled by Pallas masking

        pe_flat = pl.pallas_call(
            _simple_kernel,
            out_shape=jax.ShapeDtypeStruct((n, dim), out_dtype),
            grid_spec=pltpu.PrefetchScalarGridSpec(
                num_scalar_prefetch=0,
                grid=grid,
                in_specs=[
                    pl.BlockSpec((tn, 1), lambda i: (i, 0)),
                    pl.BlockSpec((1, dim), lambda i: (0, 0)),
                ],
                out_specs=pl.BlockSpec((tn, dim), lambda i: (i, 0)),
            ),
            compiler_params=pltpu.CompilerParams(
                dimension_semantics=("parallel",)),
        )(e2, lin2)

    return pe_flat.reshape(*lead_shape, dim)


if __name__ == "__main__":
    # Module config: dim = hidden size; registered buffer lin = ones(dim).
    dim = 32
    batch, seq = 2, 8

    key = jax.random.PRNGKey(0)
    e = jax.random.normal(key, (batch, seq), dtype=jnp.float32)
    lin = jnp.ones((dim,), dtype=jnp.float32)  # register_buffer('lin', torch.ones(dim))

    pe = jax.block_until_ready(id_encoding(e, lin))
    ref = e[..., None] * lin
    assert pe.shape == (batch, seq, dim), pe.shape
    assert pe.dtype == ref.dtype, (pe.dtype, ref.dtype)
    assert jnp.allclose(pe, ref, atol=1e-6), "mismatch (packed path, dim=32)"

    # Packed path with dim that does NOT divide 128 (period=3 -> W=384).
    dim2 = 48
    lin2 = jax.random.normal(jax.random.PRNGKey(1), (dim2,), dtype=jnp.float32)
    pe2 = jax.block_until_ready(id_encoding(e, lin2))
    ref2 = e[..., None] * lin2
    assert pe2.shape == (batch, seq, dim2), pe2.shape
    # MXU f32 matmul is multi-pass bf16 on v5e/v6e -> allow a realistic tolerance.
    assert jnp.allclose(pe2, ref2, rtol=1e-5, atol=1e-6), "mismatch (packed path, dim=48)"

    # Fallback path (dim multiple of 128) with a grid of >1 step.
    dim3 = 256
    lin3 = jax.random.normal(jax.random.PRNGKey(2), (dim3,), dtype=jnp.float32)
    pe3 = jax.block_until_ready(id_encoding(e, lin3))
    ref3 = e[..., None] * lin3
    assert pe3.shape == (batch, seq, dim3), pe3.shape
    assert jnp.allclose(pe3, ref3, atol=1e-6), "mismatch (simple path, dim=256)"

    # Larger packed run: multi-step grid with a partial (masked) last block.
    e_big = jax.random.normal(jax.random.PRNGKey(3), (3, 700), dtype=jnp.float32)
    pe_big = jax.block_until_ready(id_encoding(e_big, lin))
    ref_big = e_big[..., None] * lin
    assert pe_big.shape == (3, 700, dim), pe_big.shape
    assert jnp.allclose(pe_big, ref_big, atol=1e-6), "mismatch (packed path, partial block)"

    print("KERNEL_OK")
</pallas_src>

<mosaic_0001>
module attributes {stable_mosaic.version = 11 : i64} {
  func.func @_packed_matmul_kernel(%arg0: i32, %arg1: memref<4x4xf32, #tpu.memory_space<vmem>>, %arg2: memref<4x128xf32, #tpu.memory_space<vmem>>, %arg3: memref<4x128xf32, #tpu.memory_space<vmem>>) attributes {dimension_semantics = [#tpu.dimension_semantics<parallel>], iteration_bounds = array<i64: 1>, scalar_prefetch = 0 : i64, scratch_operands = 0 : i64, tpu.core_type = #tpu.core_type<tc>, window_params = [{transform_indices = @transform_0, window_bounds = array<i64: 4, 4>}, {pipeline_mode = #tpu.pipeline_mode<synchronous>, transform_indices = @transform_1, window_bounds = array<i64: 4, 128>}, {transform_indices = @transform_2, window_bounds = array<i64: 4, 128>}]} {
    %c0 = arith.constant 0 : index
    %c0_0 = arith.constant 0 : index
    %0 = vector.load %arg1[%c0, %c0_0] : memref<4x4xf32, #tpu.memory_space<vmem>>, vector<4x4xf32>
    %c0_1 = arith.constant 0 : index
    %c0_2 = arith.constant 0 : index
    %1 = vector.load %arg2[%c0_1, %c0_2] : memref<4x128xf32, #tpu.memory_space<vmem>>, vector<4x128xf32>
    %cst = arith.constant dense<0.000000e+00> : vector<4x128xf32>
    %2 = tpu.matmul %0, %1, %cst {dimension_numbers = #tpu.dot_dimension_numbers<[1], [0], [0], [1], [0, 0, 1, 1], [], []>} : vector<4x4xf32>, vector<4x128xf32>, vector<4x128xf32> -> vector<4x128xf32>
    %c0_3 = arith.constant 0 : index
    %c0_4 = arith.constant 0 : index
    %3 = vector.load %arg3[%c0_3, %c0_4] : memref<4x128xf32, #tpu.memory_space<vmem>>, vector<4x128xf32>
    tpu.vector_store %arg3[%c0_3, %c0_4], %2 {strides = array<i32>} : memref<4x128xf32, #tpu.memory_space<vmem>>, vector<4x128xf32>,
    return
  }
  func.func @transform_0(%arg0: i32) -> (i32, i32) {
    %c0_i32 = arith.constant 0 : i32
    %c0_i32_0 = arith.constant 0 : i32
    return %arg0, %c0_i32 : i32, i32
  }
  func.func @transform_1(%arg0: i32) -> (i32, i32) {
    %c0_i32 = arith.constant 0 : i32
    %c0_i32_0 = arith.constant 0 : i32
    %c0_i32_1 = arith.constant 0 : i32
    return %c0_i32, %c0_i32_0 : i32, i32
  }
  func.func @transform_2(%arg0: i32) -> (i32, i32) {
    %c0_i32 = arith.constant 0 : i32
    %c0_i32_0 = arith.constant 0 : i32
    return %arg0, %c0_i32 : i32, i32
  }
}

</mosaic_0001>

<llo_original>
// kernel: tpu_custom_call.1
$region0: #{tpu_custom_call.1}
  #allocation0 [shape = 'u32[]', space=smem, size = 0x4, offset = 0x4, fixed_abs, tag = 'smem constant byte address 0x4 - core index']
  #allocation1 [shape = 'u32[144,128]{1,0:T(1,128)}', space=vmem, size = 0x12000, scoped, tag = 'internal scratch']
  %s0 = inlined_call_operand.hbm [shape: f32[4,4], index: 0, kind: input, shape index: {}]
  %s1 = inlined_call_operand.hbm [shape: f32[4,128], index: 1, kind: input, shape index: {}]
  %s2 = inlined_call_operand.hbm [shape: f32[4,128], index: 2, kind: output, shape index: {}]
  %s3 = sld [smem:[#allocation0]]
  $region26: #{tpu_custom_call.1} parent=0
    _
  %s5 = ssub.s32 1, %s3
  %s6 = scalar_select 0, %s5, %s3
  $region1: #{tpu_custom_call.1} parent=0
    #allocation2 [shape = 'u8[2048]{0}', space=vmem, size = 0x800, scoped, tag = 'input window, operand 0, single buffered']
    #allocation3 [shape = 's32[1]{0}', space=sflag, size = 0x4, scoped, tag = 'scoped memory for tpu_custom_call.1']
    #allocation4 [shape = 's32[1]{0}', space=sflag, size = 0x4, scoped, tag = 'scoped memory for tpu_custom_call.1']
    #allocation5 [shape = 'u8[2048]{0}', space=vmem, size = 0x800, scoped, tag = 'input window, operand 1, single buffered']
    #allocation6 [shape = 's32[1]{0}', space=sflag, size = 0x4, scoped, tag = 'scoped memory for tpu_custom_call.1']
    #allocation7 [shape = 'u8[2048]{0}', space=vmem, size = 0x800, scoped, tag = 'output window, operand 0, single buffered']
    %7 = vsyncpa [#allocation3], 0
    %8 = vsyncpa [#allocation6], 0
    %9 = vsyncpa [#allocation4], 0
    // Predicated region
    $region2: #{tpu_custom_call.1} parent=1 // pred_check
      _
    $region3: #{tpu_custom_call.1} parent=1 // pred_check_branch
      %11 = sbr.rel (0) target = $region5
    $region4: #{tpu_custom_call.1} parent=1 // pred_region
      %s13 = ssub.s32 64, 64
      %14 = vsyncadd [#allocation3], %s13
      %s16 = sshll.u32 [#allocation2], 4
      %s17 = int_to_ptr.vmem [resolvable:$true] %s16
      %19 = dma.hbm_to_vmem [thread:$0]  %s0, 64, %s17, [#allocation3]
    $region5: #{tpu_custom_call.1} parent=1 // pred_fallthru
      _
    // Predicated region
    $region6: #{tpu_custom_call.1} parent=1 // pred_check
      _
    $region7: #{tpu_custom_call.1} parent=1 // pred_check_branch
      %21 = sbr.rel (0) target = $region9
    $region8: #{tpu_custom_call.1} parent=1 // pred_region
      %s23 = ssub.s32 64, 64
      %24 = vsyncadd [#allocation6], %s23
      %s26 = sshll.u32 [#allocation5], 4
      %s27 = int_to_ptr.vmem [resolvable:$true] %s26
      %29 = dma.hbm_to_vmem [thread:$0]  %s1, 64, %s27, [#allocation6]
    $region9: #{tpu_custom_call.1} parent=1 // pred_fallthru
      _
    // Predicated region
    $region10: #{tpu_custom_call.1} parent=1 // pred_check
      _
    $region11: #{tpu_custom_call.1} parent=1 // pred_check_branch
      %31 = sbr.rel (0) target = $region13
    $region12: #{tpu_custom_call.1} parent=1 // pred_region
      %32 = dma.done [#allocation3], 64
    $region13: #{tpu_custom_call.1} parent=1 // pred_fallthru
      _
    // Predicated region
    $region14: #{tpu_custom_call.1} parent=1 // pred_check
      _
    $region15: #{tpu_custom_call.1} parent=1 // pred_check_branch
      %34 = sbr.rel (0) target = $region17
    $region16: #{tpu_custom_call.1} parent=1 // pred_region
      %35 = dma.done [#allocation6], 64
    $region17: #{tpu_custom_call.1} parent=1 // pred_fallthru
      _
    %v36 = vld [vmem:[#allocation2] sm:$0xf]
    %v37 = vld [vmem:[#allocation5] sm:$0xf]
    %vm38 = vcmask 31744
    %v40 = vsel %vm38, %v36, 0
    %vm42 = vcmask 1043456
    %v44 = vsel %vm42, %v37, 0
    %46 = vmatprep.subr.mxu0 0.0
    %47 = vmatpush1.msra.mxu0 %v44
    %48 = vmatprep.subr.mxu0 0.0
    %49 = vmatpush1.msra.mxu0 0.0
    %50 = vmatprep.subr.mxu0 0.0
    %51 = vmatpush1.msra.mxu0 0.0
    %52 = vmatprep.subr.mxu0 0.0
    %53 = vmatpush1.msra.mxu0 0.0
    %54 = vmatprep.subr.mxu0 0.0
    %55 = vmatpush1.msra.mxu0 0.0
    %56 = vmatprep.subr.mxu0 0.0
    %57 = vmatpush1.msra.mxu0 0.0
    %58 = vmatprep.subr.mxu0 0.0
    %59 = vmatpush1.msra.mxu0 0.0
    %60 = vmatprep.subr.mxu0 0.0
    %61 = vmatpush1.msra.mxu0 0.0
    %62 = vmatprep.subr.mxu0 0.0
    %63 = vmatpush1.msra.mxu0 0.0
    %64 = vmatprep.subr.mxu0 0.0
    %65 = vmatpush1.msra.mxu0 0.0
    %66 = vmatprep.subr.mxu0 0.0
    %67 = vmatpush1.msra.mxu0 0.0
    %68 = vmatprep.subr.mxu0 0.0
    %69 = vmatpush1.msra.mxu0 0.0
    %70 = vmatprep.subr.mxu0 0.0
    %71 = vmatpush1.msra.mxu0 0.0
    %72 = vmatprep.subr.mxu0 0.0
    %73 = vmatpush1.msra.mxu0 0.0
    %74 = vmatprep.subr.mxu0 0.0
    %75 = vmatpush1.msra.mxu0 0.0
    %76 = vmatprep.subr.mxu0 0.0
    %77 = vmatpush1.msra.mxu0 0.0
    %78 = vmatprep.subr.mxu0 0.0
    %79 = vmatpush1.msra.mxu0 0.0
    %80 = vmatprep.subr.mxu0 0.0
    %81 = vmatpush1.msra.mxu0 0.0
    %82 = vmatprep.subr.mxu0 0.0
    %83 = vmatpush1.msra.mxu0 0.0
    %84 = vmatprep.subr.mxu0 0.0
    %85 = vmatpush1.msra.mxu0 0.0
    %86 = vmatprep.subr.mxu0 0.0
    %87 = vmatpush1.msra.mxu0 0.0
    %88 = vmatprep.subr.mxu0 0.0
    %89 = vmatpush1.msra.mxu0 0.0
    %90 = vmatprep.subr.mxu0 0.0
    %91 = vmatpush1.msra.mxu0 0.0
    %92 = vmatprep.subr.mxu0 0.0
    %93 = vmatpush1.msra.mxu0 0.0
    %94 = vmatprep.subr.mxu0 0.0
    %95 = vmatpush1.msra.mxu0 0.0
    %96 = vmatprep.subr.mxu0 0.0
    %97 = vmatpush1.msra.mxu0 0.0
    %98 = vmatprep.subr.mxu0 0.0
    %99 = vmatpush1.msra.mxu0 0.0
    %100 = vmatprep.subr.mxu0 0.0
    %101 = vmatpush1.msra.mxu0 0.0
    %102 = vmatprep.subr.mxu0 0.0
    %103 = vmatpush1.msra.mxu0 0.0
    %104 = vmatprep.subr.mxu0 0.0
    %105 = vmatpush1.msra.mxu0 0.0
    %106 = vmatprep.subr.mxu0 0.0
    %107 = vmatpush1.msra.mxu0 0.0
    %108 = vmatprep.subr.mxu0 0.0
    %109 = vmatpush1.msra.mxu0 0.0
    %110 = vmatprep.mubr.f32.mxu0 0.0
    %111 = vmatmul.mubr.f32.gmra.mrb[0].mxu0 %v40
    %v112 = vpop.f32.mrb[0].mxu0
    %v113 = vadd.f32 0.0, %v112
    %v114 = vpop.f32.mrb[0].mxu0
    %115 = vdwg.mxu0
    %116 = vst [vmem:[#allocation7] sm:$0xf] %v113
    // Predicated region
    $region18: #{tpu_custom_call.1} parent=1 // pred_check
      _
    $region19: #{tpu_custom_call.1} parent=1 // pred_check_branch
      %118 = sbr.rel (0) target = $region21
    $region20: #{tpu_custom_call.1} parent=1 // pred_region
      %s120 = ssub.s32 64, 64
      %121 = vsyncadd [#allocation4], %s120
      %s123 = sshll.u32 [#allocation7], 4
      %s124 = int_to_ptr.vmem [resolvable:$true] %s123
      %126 = dma.vmem_to_hbm [thread:$0]  %s124, 64, %s2, [#allocation4]
    $region21: #{tpu_custom_call.1} parent=1 // pred_fallthru
      _
    // Predicated region
    $region22: #{tpu_custom_call.1} parent=1 // pred_check
      _
    $region23: #{tpu_custom_call.1} parent=1 // pred_check_branch
      %128 = sbr.rel (0) target = $region25
    $region24: #{tpu_custom_call.1} parent=1 // pred_region
      %129 = dma.done [#allocation4], 64
    $region25: #{tpu_custom_call.1} parent=1 // pred_fallthru
      _
    %130 = vsyncpa [#allocation3], 1
    %131 = vsyncpa [#allocation6], 1
    %132 = vsyncpa [#allocation4], 1

</llo_original>
